<compile_context>
chip_gen: v7x
topology: tpu7x:2x2x1
jax: 0.10.0
libtpu: 0.0.40
codegen_flags: <defaults>
</compile_context>

<pallas_src>
import functools

import jax
import jax.numpy as jnp
from jax.experimental import pallas as pl
from jax.experimental.pallas import tpu as pltpu

LANES = 128
MAX_ROW_TILE = 4096          # (4096, 128) f32 block = 2 MiB / input / buffer


def _num_tensorcores_per_device() -> int:
    """Best-effort TensorCore count behind one JAX device (1 for v5e/v6e)."""
    try:
        kind = jax.devices()[0].device_kind.lower()
    except Exception:
        return 1
    if any(tag in kind for tag in ("lite", "v5e", "v6e", "v2", "v3")):
        return 1
    return 2  # v4 / v5p / v7x expose 2 TensorCores behind one device


def _loss_kernel(p_ref, t_ref, o_ref, acc_ref, *,
                 min_target: float, n_rows: int, row_tile: int,
                 blocks_per_split: int, num_blocks: int):
    s = pl.program_id(0)       # split index ("parallel" axis)
    i = pl.program_id(1)       # block within split (sequential reduction axis)

    # Zero the per-split vector accumulator at the start of each split.
    @pl.when(i == 0)
    def _():
        acc_ref[...] = jnp.zeros_like(acc_ref)

    # Cast after the DMA so HBM traffic stays in the native input dtype.
    p = p_ref[...].astype(jnp.float32)
    t = t_ref[...].astype(jnp.float32)

    denom = jnp.maximum(t, jnp.float32(min_target))   # clamp(y_true, min=...)
    rel = (p - t) / denom
    sq = rel * rel

    def accumulate(vals):
        if row_tile % 8 == 0:
            # Whole-vreg VALU adds; the sublane/lane reduce is deferred to the
            # single final reduce per split.
            acc_ref[...] += vals.reshape(row_tile // 8, 8, LANES).sum(axis=0)
        else:
            # Tiny single-block fallback (rows not a multiple of 8).
            acc_ref[...] += jnp.sum(vals, axis=0, keepdims=True)

    ragged = (n_rows % row_tile) != 0   # static: does a partial block exist?
    if ragged:
        b = s * blocks_per_split + i    # global block index
        is_last = b == (num_blocks - 1)

        # Fast path: interior blocks never pay for the mask.
        @pl.when(jnp.logical_not(is_last))
        def _():
            accumulate(sq)

        # Edge path: mask rows past the real data (Pallas-padded garbage).
        @pl.when(is_last)
        def _():
            row0 = b * row_tile
            row_idx = row0 + jax.lax.broadcasted_iota(
                jnp.int32, (row_tile, 1), 0)
            accumulate(jnp.where(row_idx < n_rows, sq, jnp.float32(0.0)))
    else:
        accumulate(sq)

    # Single cross-sublane + cross-lane reduce per split, written once.
    @pl.when(i == pl.num_programs(1) - 1)
    def _():
        o_ref[0, 0] = jnp.sum(acc_ref[...])


def safe_relative_mse_loss(y_pred, y_true, min_target: float = 0.1):
    """Pallas TPU implementation of SafeRelativeMSELoss.forward."""
    assert y_pred.shape == y_true.shape
    n = int(y_pred.size)
    if n == 0:
        return jnp.float32(jnp.nan)     # torch.mean over empty -> nan

    p = jnp.ravel(y_pred)
    t = jnp.ravel(y_true)

    n_main = (n // LANES) * LANES       # elements handled by the kernel
    tail = n - n_main                   # <128 ragged tail -> plain jnp

    total = jnp.float32(0.0)

    if tail:
        # Tiny (<128 element) tail reduced with a handful of plain-jnp ops;
        # avoids padding/copying the full inputs just for the last lane row.
        pt = p[n_main:].astype(jnp.float32)
        tt = t[n_main:].astype(jnp.float32)
        dt = jnp.maximum(tt, jnp.float32(min_target))
        rt = (pt - tt) / dt
        total = total + jnp.sum(rt * rt)

    if n_main:
        rows = n_main // LANES
        # n % 128 == 0: pure bitcast reshape, zero-copy.  Ragged n: prefix
        # slice of full lane rows (only materializes in the rare ragged case).
        p2 = (p if tail == 0 else p[:n_main]).reshape(rows, LANES)
        t2 = (t if tail == 0 else t[:n_main]).reshape(rows, LANES)

        # Tile / grid selection.
        if rows <= MAX_ROW_TILE:
            row_tile, nb = rows, 1      # single full-array block
        else:
            row_tile = MAX_ROW_TILE
            nb = pl.cdiv(rows, row_tile)

        # Split across TensorCores only where there are 2 of them, and only
        # when the block count divides evenly (no clamped duplicate blocks).
        splits = 2 if (_num_tensorcores_per_device() >= 2
                       and nb >= 2 and nb % 2 == 0) else 1
        bps = nb // splits              # blocks per split

        acc_rows = 8 if row_tile % 8 == 0 else 1

        kernel = functools.partial(
            _loss_kernel,
            min_target=float(min_target),
            n_rows=rows,
            row_tile=row_tile,
            blocks_per_split=bps,
            num_blocks=nb,
        )

        itemsize = jnp.dtype(p2.dtype).itemsize
        cost = pl.CostEstimate(
            flops=5 * n_main,
            transcendentals=0,
            bytes_accessed=2 * rows * LANES * itemsize + 4 * splits,
        )

        def data_index_map(s, i):
            return (s * bps + i, 0)

        partials = pl.pallas_call(
            kernel,
            out_shape=jax.ShapeDtypeStruct((splits, 1), jnp.float32),
            grid_spec=pltpu.PrefetchScalarGridSpec(
                num_scalar_prefetch=0,
                grid=(splits, bps),
                in_specs=[
                    pl.BlockSpec((row_tile, LANES), data_index_map),
                    pl.BlockSpec((row_tile, LANES), data_index_map),
                ],
                out_specs=pl.BlockSpec(
                    (1, 1), lambda s, i: (s, 0), memory_space=pltpu.SMEM
                ),
                scratch_shapes=[pltpu.VMEM((acc_rows, LANES), jnp.float32)],
            ),
            compiler_params=pltpu.CompilerParams(
                dimension_semantics=("parallel", "arbitrary"),
            ),
            cost_estimate=cost,
        )(p2, t2)

        total = total + jnp.sum(partials)

    # Normalize by the ORIGINAL element count.
    return total / jnp.float32(n)


def _reference(y_pred, y_true, min_target=0.1):
    yp = y_pred.astype(jnp.float32)
    yt = y_true.astype(jnp.float32)
    denom = jnp.maximum(yt, jnp.float32(min_target))
    rel = (yp - yt) / denom
    return jnp.mean(rel * rel)


if __name__ == "__main__":
    key = jax.random.PRNGKey(0)
    k1, k2, k3, k4, k5, k6 = jax.random.split(key, 6)

    # 1) Primary check: typical regression-target tensor (n % 128 == 0 fast path).
    shape = (2, 4, 16, 16)
    y_pred = jax.random.normal(k1, shape, dtype=jnp.float32)
    y_true = jax.random.normal(k2, shape, dtype=jnp.float32) * 0.5
    loss = jax.block_until_ready(safe_relative_mse_loss(y_pred, y_true, 0.1))
    ref = _reference(y_pred, y_true, 0.1)
    assert jnp.allclose(loss, ref, rtol=1e-5, atol=1e-5), (loss, ref)

    # 2) Ragged-size check: 7 full lane rows + a 37-element jnp tail.
    y_pred2 = jax.random.normal(k3, (933,), dtype=jnp.float32)
    y_true2 = jax.random.normal(k4, (933,), dtype=jnp.float32) * 0.5
    loss2 = jax.block_until_ready(safe_relative_mse_loss(y_pred2, y_true2, 0.1))
    ref2 = _reference(y_pred2, y_true2, 0.1)
    assert jnp.allclose(loss2, ref2, rtol=1e-5, atol=1e-5), (loss2, ref2)

    # 3) Multi-block check: 4100 lane rows -> 2 blocks, gated edge mask, and the
    #    2-way TensorCore split where available.  Slightly looser tolerance for
    #    f32 accumulation-order differences over ~5e5 elements.
    shape3 = (2, 4100, 64)
    y_pred3 = jax.random.normal(k5, shape3, dtype=jnp.float32)
    y_true3 = jax.random.normal(k6, shape3, dtype=jnp.float32) * 0.5
    loss3 = jax.block_until_ready(safe_relative_mse_loss(y_pred3, y_true3, 0.1))
    ref3 = _reference(y_pred3, y_true3, 0.1)
    assert jnp.allclose(loss3, ref3, rtol=1e-4, atol=1e-5), (loss3, ref3)

    print("KERNEL_OK")
</pallas_src>

<mosaic_0001>
module attributes {stable_mosaic.version = 11 : i64} {
  func.func @_loss_kernel(%arg0: i32, %arg1: i32, %arg2: memref<16x128xf32, #tpu.memory_space<vmem>>, %arg3: memref<16x128xf32, #tpu.memory_space<vmem>>, %arg4: memref<1x1xf32, #tpu.memory_space<smem>>, %arg5: memref<8x128xf32, #tpu.memory_space<vmem>>) attributes {dimension_semantics = [#tpu.dimension_semantics<parallel>, #tpu.dimension_semantics<arbitrary>], iteration_bounds = array<i64: 1, 1>, scalar_prefetch = 0 : i64, scratch_operands = 1 : i64, tpu.core_type = #tpu.core_type<tc>, window_params = [{transform_indices = @transform_0, window_bounds = array<i64: 16, 128>}, {transform_indices = @transform_1, window_bounds = array<i64: 16, 128>}, {transform_indices = @transform_2, window_bounds = array<i64: 1, 1>}]} {
    %c0_i32 = arith.constant 0 : i32
    %0 = arith.cmpi eq, %arg1, %c0_i32 : i32
    %1 = arith.extui %0 : i1 to i32
    %c0_i32_0 = arith.constant 0 : i32
    %2 = arith.cmpi ne, %1, %c0_i32_0 : i32
    scf.if %2 {
      %cst_11 = arith.constant 0.000000e+00 : f32
      %18 = vector.broadcast %cst_11 : f32 to vector<8x128xf32>
      %c0_12 = arith.constant 0 : index
      %c0_13 = arith.constant 0 : index
      %19 = vector.load %arg5[%c0_12, %c0_13] : memref<8x128xf32, #tpu.memory_space<vmem>>, vector<8x128xf32>
      tpu.vector_store %arg5[%c0_12, %c0_13], %18 {strides = array<i32>} : memref<8x128xf32, #tpu.memory_space<vmem>>, vector<8x128xf32>,
    } else {
    }
    %c0 = arith.constant 0 : index
    %c0_1 = arith.constant 0 : index
    %3 = vector.load %arg2[%c0, %c0_1] : memref<16x128xf32, #tpu.memory_space<vmem>>, vector<16x128xf32>
    %c0_2 = arith.constant 0 : index
    %c0_3 = arith.constant 0 : index
    %4 = vector.load %arg3[%c0_2, %c0_3] : memref<16x128xf32, #tpu.memory_space<vmem>>, vector<16x128xf32>
    %cst = arith.constant 1.000000e-01 : f32
    %5 = vector.broadcast %cst : f32 to vector<16x128xf32>
    %6 = arith.maximumf %4, %5 : vector<16x128xf32>
    %7 = arith.subf %3, %4 : vector<16x128xf32>
    %8 = arith.divf %7, %6 : vector<16x128xf32>
    %9 = arith.mulf %8, %8 : vector<16x128xf32>
    %c0_4 = arith.constant 0 : index
    %c0_5 = arith.constant 0 : index
    %10 = vector.load %arg5[%c0_4, %c0_5] : memref<8x128xf32, #tpu.memory_space<vmem>>, vector<8x128xf32>
    %11 = vector.shape_cast %9 : vector<16x128xf32> to vector<2x8x128xf32>
    %cst_6 = arith.constant dense<0.000000e+00> : vector<8x128xf32>
    %12 = vector.multi_reduction <add>, %11, %cst_6 [0] : vector<2x8x128xf32> to vector<8x128xf32>
    %13 = arith.addf %10, %12 : vector<8x128xf32>
    %c0_7 = arith.constant 0 : index
    %c0_8 = arith.constant 0 : index
    %14 = vector.load %arg5[%c0_7, %c0_8] : memref<8x128xf32, #tpu.memory_space<vmem>>, vector<8x128xf32>
    tpu.vector_store %arg5[%c0_7, %c0_8], %13 {strides = array<i32>} : memref<8x128xf32, #tpu.memory_space<vmem>>, vector<8x128xf32>,
    %c0_i32_9 = arith.constant 0 : i32
    %15 = arith.cmpi eq, %arg1, %c0_i32_9 : i32
    %16 = arith.extui %15 : i1 to i32
    %c0_i32_10 = arith.constant 0 : i32
    %17 = arith.cmpi ne, %16, %c0_i32_10 : i32
    scf.if %17 {
      %c0_11 = arith.constant 0 : index
      %c0_12 = arith.constant 0 : index
      %18 = vector.load %arg5[%c0_11, %c0_12] : memref<8x128xf32, #tpu.memory_space<vmem>>, vector<8x128xf32>
      %19 = vector.shape_cast %18 : vector<8x128xf32> to vector<1x8x128xf32>
      %cst_13 = arith.constant dense<0.000000e+00> : vector<1xf32>
      %20 = vector.multi_reduction <add>, %19, %cst_13 [1, 2] : vector<1x8x128xf32> to vector<1xf32>
      %21 = vector.shape_cast %20 : vector<1xf32> to vector<1x1x1xf32>
      %22 = vector.extract %21[0, 0, 0] : f32 from vector<1x1x1xf32>
      %c0_14 = arith.constant 0 : index
      %c0_15 = arith.constant 0 : index
      %23 = memref.load %arg4[%c0_14, %c0_15] : memref<1x1xf32, #tpu.memory_space<smem>>
      memref.store %22, %arg4[%c0_14, %c0_15] : memref<1x1xf32, #tpu.memory_space<smem>>
    } else {
    }
    return
  }
  func.func @transform_0(%arg0: i32, %arg1: i32) -> (i32, i32) {
    %c1_i32 = arith.constant 1 : i32
    %0 = arith.muli %arg0, %c1_i32 : i32
    %1 = arith.addi %0, %arg1 : i32
    %c0_i32 = arith.constant 0 : i32
    %c0_i32_0 = arith.constant 0 : i32
    return %1, %c0_i32 : i32, i32
  }
  func.func @transform_1(%arg0: i32, %arg1: i32) -> (i32, i32) {
    %c1_i32 = arith.constant 1 : i32
    %0 = arith.muli %arg0, %c1_i32 : i32
    %1 = arith.addi %0, %arg1 : i32
    %c0_i32 = arith.constant 0 : i32
    %c0_i32_0 = arith.constant 0 : i32
    return %1, %c0_i32 : i32, i32
  }
  func.func @transform_2(%arg0: i32, %arg1: i32) -> (i32, i32) {
    %c0_i32 = arith.constant 0 : i32
    %c0_i32_0 = arith.constant 0 : i32
    return %arg0, %c0_i32 : i32, i32
  }
}

</mosaic_0001>

<llo_original>
// kernel: tpu_custom_call.1
$region0: #{tpu_custom_call.1}
  #allocation0 [shape = 'u32[]', space=smem, size = 0x4, offset = 0x4, fixed_abs, tag = 'smem constant byte address 0x4 - core index']
  #allocation1 [shape = 'u32[144,128]{1,0:T(1,128)}', space=vmem, size = 0x12000, scoped, tag = 'internal scratch']
  #allocation2 [shape = 'f32[8,128]{1,0:T(8,128)}', space=vmem, size = 0x1000, scoped, tag = 'scratch operand']
  %s0 = inlined_call_operand.hbm [shape: f32[16,128], index: 0, kind: input, shape index: {}]
  %s1 = inlined_call_operand.hbm [shape: f32[16,128], index: 1, kind: input, shape index: {}]
  %s2 = inlined_call_operand.hbm [shape: f32[1,1], index: 2, kind: output, shape index: {}]
  %s3 = sld [smem:[#allocation0]]
  $region34: #{tpu_custom_call.1} parent=0
    _
  %s5 = ssub.s32 1, %s3
  %s6 = scalar_select 0, %s5, %s3
  $region1: #{tpu_custom_call.1} parent=0
    #allocation3 [shape = 'u8[8192]{0}', space=vmem, size = 0x2000, scoped, tag = 'input window, operand 0, single buffered']
    #allocation4 [shape = 's32[1]{0}', space=sflag, size = 0x4, scoped, tag = 'scoped memory for tpu_custom_call.1']
    #allocation5 [shape = 's32[1]{0}', space=sflag, size = 0x4, scoped, tag = 'scoped memory for tpu_custom_call.1']
    #allocation6 [shape = 'u8[8192]{0}', space=vmem, size = 0x2000, scoped, tag = 'input window, operand 1, single buffered']
    #allocation7 [shape = 's32[1]{0}', space=sflag, size = 0x4, scoped, tag = 'scoped memory for tpu_custom_call.1']
    #allocation8 [shape = 'u8[512]{0}', space=smem, size = 0x200, scoped, tag = 'output window, operand 0, single buffered']
    %7 = vsyncpa [#allocation4], 0
    %8 = vsyncpa [#allocation7], 0
    %9 = vsyncpa [#allocation5], 0
    // Predicated region
    $region2: #{tpu_custom_call.1} parent=1 // pred_check
      _
    $region3: #{tpu_custom_call.1} parent=1 // pred_check_branch
      %11 = sbr.rel (0) target = $region5
    $region4: #{tpu_custom_call.1} parent=1 // pred_region
      %s12 = sadd.s32 0, 0
      %s13 = smul.u32 2, %s12
      %s15 = ssub.s32 256, 256
      %16 = vsyncadd [#allocation4], %s15
      %s17 = smul.addr %s13, 128
      %s18 = scalar_lea.hbm %s0, %s17
      %s19 = sshll.u32 [#allocation3], 4
      %s20 = int_to_ptr.vmem [resolvable:$true] %s19
      %25 = dma.hbm_to_vmem [thread:$0]  %s18, 256, %s20, [#allocation4], 128, 128, 8
    $region5: #{tpu_custom_call.1} parent=1 // pred_fallthru
      _
    // Predicated region
    $region6: #{tpu_custom_call.1} parent=1 // pred_check
      _
    $region7: #{tpu_custom_call.1} parent=1 // pred_check_branch
      %27 = sbr.rel (0) target = $region9
    $region8: #{tpu_custom_call.1} parent=1 // pred_region
      %s28 = sadd.s32 0, 0
      %s29 = smul.u32 2, %s28
      %s31 = ssub.s32 256, 256
      %32 = vsyncadd [#allocation7], %s31
      %s33 = smul.addr %s29, 128
      %s34 = scalar_lea.hbm %s1, %s33
      %s35 = sshll.u32 [#allocation6], 4
      %s36 = int_to_ptr.vmem [resolvable:$true] %s35
      %41 = dma.hbm_to_vmem [thread:$0]  %s34, 256, %s36, [#allocation7], 128, 128, 8
    $region9: #{tpu_custom_call.1} parent=1 // pred_fallthru
      _
    // Predicated region
    $region10: #{tpu_custom_call.1} parent=1 // pred_check
      _
    $region11: #{tpu_custom_call.1} parent=1 // pred_check_branch
      %43 = sbr.rel (0) target = $region13
    $region12: #{tpu_custom_call.1} parent=1 // pred_region
      %44 = dma.done [#allocation4], 256
    $region13: #{tpu_custom_call.1} parent=1 // pred_fallthru
      _
    // Predicated region
    $region14: #{tpu_custom_call.1} parent=1 // pred_check
      _
    $region15: #{tpu_custom_call.1} parent=1 // pred_check_branch
      %46 = sbr.rel (0) target = $region17
    $region16: #{tpu_custom_call.1} parent=1 // pred_region
      %47 = dma.done [#allocation7], 256
    $region17: #{tpu_custom_call.1} parent=1 // pred_fallthru
      _
    %s48 = sadd.s32 0, 0
    %s49 = smul.u32 2, %s48
    %s50 = sadd.s32 0, 0
    %s51 = smul.u32 2, %s50
    %p52 = scmp.eq.s32.totalorder 0, 0
    // Predicated region
    $region18: #{tpu_custom_call.1} parent=1 // pred_check
      %p53 = pneg %p52
    $region19: #{tpu_custom_call.1} parent=1 // pred_check_branch
      %55 = sbr.rel (%p53) target = $region21
    $region20: #{tpu_custom_call.1} parent=1 // pred_region
      %56 = vst [vmem:[#allocation2] sm:$0xff] 0.0
    $region21: #{tpu_custom_call.1} parent=1 // pred_fallthru
      _
    %v57 = vld [vmem:[#allocation3] sm:$0xff]
    %v58 = vld [vmem:[#allocation3 + $0x8] sm:$0xff]
    %v59 = vld [vmem:[#allocation6] sm:$0xff]
    %v60 = vld [vmem:[#allocation6 + $0x8] sm:$0xff]
    %v61 = vmax.f32 %v59, 0.1
    %v62 = vmax.f32 %v60, 0.1
    %v63 = vsub.f32 %v57, %v59
    %v64 = vsub.f32 %v58, %v60
    %v65 = vrcp.pop %v61
    %v66 = vmul.f32 %v63, %v65
    %v67 = vrcp.pop %v62
    %v68 = vmul.f32 %v64, %v67
    %v69 = vmul.f32 %v66, %v66
    %v70 = vmul.f32 %v68, %v68
    %v71 = vld [vmem:[#allocation2] sm:$0xff]
    %v72 = vadd.f32 %v69, %v70
    %v73 = vadd.f32 %v71, %v72
    %74 = vst [vmem:[#allocation2] sm:$0xff] %v73
    // Predicated region
    $region22: #{tpu_custom_call.1} parent=1 // pred_check
      %p75 = pneg %p52
    $region23: #{tpu_custom_call.1} parent=1 // pred_check_branch
      %77 = sbr.rel (%p75) target = $region25
    $region24: #{tpu_custom_call.1} parent=1 // pred_region
      %v78 = vld [vmem:[#allocation2] sm:$0xff]
      %79 = vadd.xlane.f32.xlu0 %v78
      %v80 = vpop.xlane.xlu0 %79
      %v81 = vrot.slane %v80, 4
      %v82 = vadd.f32 %v80, %v81
      %v83 = vrot.slane %v82, 2
      %v84 = vadd.f32 %v82, %v83
      %v85 = vrot.slane %v84, 1
      %v86 = vadd.f32 %v84, %v85
      %s87 = vtos %v86
      %s88 = scalar_lea.smem [#allocation8], 0
      %89 = sst [smem:[%s88]] %s87
    $region25: #{tpu_custom_call.1} parent=1 // pred_fallthru
      _
    // Predicated region
    $region26: #{tpu_custom_call.1} parent=1 // pred_check
      _
    $region27: #{tpu_custom_call.1} parent=1 // pred_check_branch
      %91 = sbr.rel (0) target = $region29
    $region28: #{tpu_custom_call.1} parent=1 // pred_region
      %s93 = ssub.s32 16, 16
      %94 = vsyncadd [#allocation5], %s93
      %97 = dma.smem_to_hbm [#allocation8], 16, %s2, [#allocation5]
    $region29: #{tpu_custom_call.1} parent=1 // pred_fallthru
      _
    // Predicated region
    $region30: #{tpu_custom_call.1} parent=1 // pred_check
      _
    $region31: #{tpu_custom_call.1} parent=1 // pred_check_branch
      %99 = sbr.rel (0) target = $region33
    $region32: #{tpu_custom_call.1} parent=1 // pred_region
      %100 = dma.done [#allocation5], 16
    $region33: #{tpu_custom_call.1} parent=1 // pred_fallthru
      _
    %101 = sfence
    %102 = vsyncpa [#allocation4], 1
    %103 = vsyncpa [#allocation7], 1
    %104 = vsyncpa [#allocation5], 1

</llo_original>
